<compile_context>
chip_gen: v5e
topology: v5e:2x2
jax: 0.10.0
libtpu: 0.0.40
codegen_flags: <defaults>
</compile_context>

<pallas_src>
import functools

import jax
import jax.numpy as jnp
from jax import lax
from jax.experimental import pallas as pl
from jax.experimental.pallas import tpu as pltpu


def _round_up(x, m):
    return (x + m - 1) // m * m


def _choose_l_blk(L_out, C_in_pad, C_out_pad, K, halo, comp_bytes, out_bytes,
                  vmem_budget_bytes, max_l_blk):
    """Largest multiple-of-128 output tile whose working set fits the VMEM budget."""
    cap = min(max_l_blk, _round_up(max(L_out, 1), 128))
    best = 128
    for cand in range(128, cap + 1, 128):
        l_in_blk = _round_up(cand + halo, 128)
        need = (2 * C_in_pad * l_in_blk * comp_bytes          # input window, double-buffered
                + K * C_in_pad * cand * comp_bytes            # im2col block (worst case)
                + C_out_pad * cand * 4                        # f32 accumulator
                + 2 * C_out_pad * cand * out_bytes            # output block, double-buffered
                + 2 * C_out_pad * K * C_in_pad * comp_bytes   # weight
                + 2 * C_out_pad * 4)                          # bias
        if need <= vmem_budget_bytes:
            best = cand
    return best


def _leaky_conv_kernel(x_ref, w_ref, b_ref, o_ref, *, K, dilation, L_blk, C_in_pad,
                       negative_slope, compute_dtype, fuse_im2col):
    # x_ref: (1, 1, C_in_pad, L_in_blk)   zero-padded input window (with halo), one (n, l) tile
    # w_ref: (C_out_pad, K*C_in_pad)      im2col weight (k-major, then ci)
    # b_ref: (C_out_pad, 1)               bias (f32)
    # o_ref: (1, C_out_pad, L_blk)        output block, L_blk a multiple of 128 (lane-dense store)
    x = x_ref[0, 0]                                       # (C_in_pad, L_in_blk)
    x = jnp.where(x > 0, x, negative_slope * x)           # LeakyReLU (VPU); zeros stay zero
    x = x.astype(compute_dtype)
    w = w_ref[...]

    if fuse_im2col:
        # Small C_in: stack K lane-shifted slices -> one deep MXU contraction over K*C_in_pad.
        xcol = jnp.concatenate(
            [x[:, k * dilation: k * dilation + L_blk] for k in range(K)], axis=0)
        acc = jnp.dot(w, xcol, preferred_element_type=jnp.float32)
    else:
        # Large C_in (C_in_pad >= 128): K accumulating matmuls, no materialized xcol buffer.
        acc = jnp.dot(w[:, :C_in_pad], x[:, :L_blk],
                      preferred_element_type=jnp.float32)
        for k in range(1, K):
            acc = acc + jnp.dot(
                w[:, k * C_in_pad:(k + 1) * C_in_pad],
                x[:, k * dilation: k * dilation + L_blk],
                preferred_element_type=jnp.float32)

    # Bias folded into the final (lane-dense) store.
    o_ref[0] = (acc + b_ref[...]).astype(o_ref.dtype)


def leaky_conv(x, weight, bias, *, kernel_size, dilation, negative_slope=0.01,
               compute_dtype=None, max_l_blk=2048,
               vmem_budget_bytes=40 * 1024 * 1024):
    """x: (N, C_in, L), weight: (C_out, C_in, K), bias: (C_out,).

    Matches PyTorch: Conv1d(C_in, C_out, K, dilation=D, padding=(K-1)*D//2)(LeakyReLU(x)).
    Pass compute_dtype=jnp.bfloat16 on v6e/v7x for ~2x DMA/MXU throughput (accumulation
    stays f32; output keeps x.dtype).

    Note: with C_out_pad and K*C_in_pad far below the MXU dimension the kernel is
    DMA/VPU-bound, so the bf16 / store-traffic knobs matter more than matmul shape.
    """
    N, C_in, L = x.shape
    C_out = weight.shape[0]
    K = kernel_size
    if compute_dtype is None:
        compute_dtype = x.dtype
    out_dtype = x.dtype

    pad = (K - 1) * dilation // 2
    halo = dilation * (K - 1)
    # PyTorch Conv1d output length (stride=1). Note L_out != L when (K-1)*dilation is odd.
    L_out = L + 2 * pad - halo

    # Hardware-friendly padding: sublane-dense channels, lane-dense length tiles.
    C_in_pad = _round_up(C_in, 8)
    C_out_pad = _round_up(C_out, 8)

    comp_bytes = jnp.dtype(compute_dtype).itemsize
    out_bytes = jnp.dtype(out_dtype).itemsize
    L_blk = _choose_l_blk(L_out, C_in_pad, C_out_pad, K, halo, comp_bytes, out_bytes,
                          vmem_budget_bytes, max_l_blk)
    num_l = -(-L_out // L_blk)                  # ceil-div
    L_out_pad = num_l * L_blk
    L_in_blk = _round_up(L_blk + halo, 128)     # lane-aligned input window per tile

    # Pad the input once (left conv padding + right padding so every tile window is in bounds),
    # cast to compute_dtype in HBM (halves DMA bytes for the bf16 path).
    total_in = (num_l - 1) * L_blk + L_in_blk
    right_pad = total_in - pad - L              # >= pad >= 0
    x_base = jnp.pad(
        x, ((0, 0), (0, C_in_pad - C_in), (pad, right_pad))).astype(compute_dtype)

    # Materialize the per-tile overlapping windows (halo duplicated in HBM) so the grid can
    # use plain Blocked indexing; the duplicated bytes are only ~halo/L_blk of the input.
    if num_l == 1:
        x_tiles = x_base[:, None]                                   # (N, 1, C_in_pad, L_in_blk)
    else:
        x_tiles = jnp.stack(
            [x_base[:, :, t * L_blk: t * L_blk + L_in_blk] for t in range(num_l)],
            axis=1)                                                 # (N, num_l, C_in_pad, L_in_blk)

    # Pre-transpose/reshape weight: (C_out, C_in, K) -> (C_out_pad, K*C_in_pad),
    # row order k-major then ci, matching the kernel's xcol / per-tap slices.
    w = jnp.transpose(weight, (0, 2, 1))                            # (C_out, K, C_in)
    w = jnp.pad(w, ((0, C_out_pad - C_out), (0, 0), (0, C_in_pad - C_in)))
    w2 = w.reshape(C_out_pad, K * C_in_pad).astype(compute_dtype)

    b2 = jnp.pad(bias, (0, C_out_pad - C_out)).reshape(C_out_pad, 1).astype(jnp.float32)

    # Small C_in: fused im2col feeds the MXU a deeper contraction. Large C_in: per-tap
    # accumulating matmuls avoid the xcol VMEM buffer and its store traffic.
    fuse_im2col = C_in_pad < 128

    kernel = functools.partial(
        _leaky_conv_kernel, K=K, dilation=dilation, L_blk=L_blk, C_in_pad=C_in_pad,
        negative_slope=negative_slope, compute_dtype=compute_dtype,
        fuse_im2col=fuse_im2col)

    # TODO(synk): for many-tile / DMA-exposed cases, try pipeline_mode=pl.Buffered(3) on the
    # input spec; at demo scale (2 grid steps) it changes nothing.
    out = pl.pallas_call(
        kernel,
        out_shape=jax.ShapeDtypeStruct((N, C_out_pad, L_out_pad), out_dtype),
        grid_spec=pltpu.PrefetchScalarGridSpec(
            num_scalar_prefetch=0,
            grid=(N, num_l),
            in_specs=[
                pl.BlockSpec((1, 1, C_in_pad, L_in_blk), lambda n, l: (n, l, 0, 0)),
                pl.BlockSpec((C_out_pad, K * C_in_pad), lambda n, l: (0, 0)),
                pl.BlockSpec((C_out_pad, 1), lambda n, l: (0, 0)),
            ],
            out_specs=pl.BlockSpec((1, C_out_pad, L_blk), lambda n, l: (n, 0, l)),
        ),
        compiler_params=pltpu.CompilerParams(
            dimension_semantics=("parallel", "parallel"),
            vmem_limit_bytes=48 * 1024 * 1024),
    )(x_tiles, w2, b2)

    # Strip channel / length padding.
    return out[:, :C_out, :L_out]


def leaky_conv_reference(x, weight, bias, *, dilation, negative_slope=0.01):
    """Pure-JAX reference mirroring PyTorch LeakyReLU + Conv1d."""
    K = weight.shape[-1]
    pad = (K - 1) * dilation // 2
    h = jnp.where(x > 0, x, negative_slope * x)
    y = lax.conv_general_dilated(
        h, weight,
        window_strides=(1,),
        padding=[(pad, pad)],
        rhs_dilation=(dilation,),
        dimension_numbers=("NCH", "OIH", "NCH"),
    )
    return y + bias[None, :, None]


if __name__ == "__main__":
    # Small shapes consistent with the module: Conv1d on (N, C_in, L).
    N, C_in, C_out, L = 2, 4, 8, 16
    kernel_size, dilation = 3, 2

    key = jax.random.PRNGKey(0)
    kx, kw, kb = jax.random.split(key, 3)
    x = jax.random.normal(kx, (N, C_in, L), dtype=jnp.float32)
    weight = 0.02 * jax.random.normal(kw, (C_out, C_in, kernel_size), dtype=jnp.float32)
    bias = 0.01 * jax.random.normal(kb, (C_out,), dtype=jnp.float32)

    ref = leaky_conv_reference(x, weight, bias, dilation=dilation)

    # f32 path: tight correctness check.
    out = leaky_conv(x, weight, bias, kernel_size=kernel_size, dilation=dilation)
    out = jax.block_until_ready(out)
    assert out.shape == ref.shape, (out.shape, ref.shape)
    assert jnp.allclose(out, ref, atol=1e-5, rtol=1e-5), float(jnp.max(jnp.abs(out - ref)))

    # bf16 compute path (v6e/v7x fast path): looser tolerance, precision-only difference.
    out_bf16 = leaky_conv(x, weight, bias, kernel_size=kernel_size, dilation=dilation,
                          compute_dtype=jnp.bfloat16)
    out_bf16 = jax.block_until_ready(out_bf16)
    assert out_bf16.shape == ref.shape, (out_bf16.shape, ref.shape)
    assert jnp.allclose(out_bf16, ref, atol=1e-2, rtol=5e-2), \
        float(jnp.max(jnp.abs(out_bf16 - ref)))

    print("KERNEL_OK")
</pallas_src>

<mosaic_0001>
module attributes {stable_mosaic.version = 11 : i64} {
  func.func @_leaky_conv_kernel(%arg0: i32, %arg1: i32, %arg2: memref<1x1x8x256xf32, #tpu.memory_space<vmem>>, %arg3: memref<8x24xf32, #tpu.memory_space<vmem>>, %arg4: memref<8x1xf32, #tpu.memory_space<vmem>>, %arg5: memref<1x8x128xf32, #tpu.memory_space<vmem>>) attributes {dimension_semantics = [#tpu.dimension_semantics<parallel>, #tpu.dimension_semantics<parallel>], iteration_bounds = array<i64: 2, 1>, scalar_prefetch = 0 : i64, scratch_operands = 0 : i64, tpu.core_type = #tpu.core_type<tc>, window_params = [{transform_indices = @transform_0, window_bounds = array<i64: 1, 1, 8, 256>}, {pipeline_mode = #tpu.pipeline_mode<synchronous>, transform_indices = @transform_1, window_bounds = array<i64: 8, 24>}, {pipeline_mode = #tpu.pipeline_mode<synchronous>, transform_indices = @transform_2, window_bounds = array<i64: 8, 1>}, {transform_indices = @transform_3, window_bounds = array<i64: 1, 8, 128>}]} {
    %c0 = arith.constant 0 : index
    %c0_0 = arith.constant 0 : index
    %c0_1 = arith.constant 0 : index
    %c0_2 = arith.constant 0 : index
    %0 = vector.load %arg2[%c0, %c0_0, %c0_1, %c0_2] : memref<1x1x8x256xf32, #tpu.memory_space<vmem>>, vector<1x1x8x256xf32>
    %1 = vector.shape_cast %0 : vector<1x1x8x256xf32> to vector<8x256xf32>
    %cst = arith.constant 0.000000e+00 : f32
    %2 = vector.broadcast %cst : f32 to vector<8x256xf32>
    %3 = arith.cmpf ogt, %1, %2 : vector<8x256xf32>
    %cst_3 = arith.constant 0.00999999977 : f32
    %4 = vector.broadcast %cst_3 : f32 to vector<8x256xf32>
    %5 = arith.mulf %4, %1 : vector<8x256xf32>
    %6 = arith.select %3, %1, %5 : vector<8x256xi1>, vector<8x256xf32>
    %c0_4 = arith.constant 0 : index
    %c0_5 = arith.constant 0 : index
    %7 = vector.load %arg3[%c0_4, %c0_5] : memref<8x24xf32, #tpu.memory_space<vmem>>, vector<8x24xf32>
    %8 = vector.extract_strided_slice %6 {offsets = [0, 0], sizes = [8, 128], strides = [1, 1]} : vector<8x256xf32> to vector<8x128xf32>
    %9 = vector.extract_strided_slice %6 {offsets = [0, 2], sizes = [8, 128], strides = [1, 1]} : vector<8x256xf32> to vector<8x128xf32>
    %10 = vector.extract_strided_slice %6 {offsets = [0, 4], sizes = [8, 128], strides = [1, 1]} : vector<8x256xf32> to vector<8x128xf32>
    %11 = tpu.concatenate %8, %9, %10 in 0 : vector<8x128xf32>, vector<8x128xf32>, vector<8x128xf32> -> vector<24x128xf32>
    %cst_6 = arith.constant dense<0.000000e+00> : vector<8x128xf32>
    %12 = tpu.matmul %7, %11, %cst_6 {dimension_numbers = #tpu.dot_dimension_numbers<[1], [0], [0], [1], [0, 0, 1, 1], [], []>} : vector<8x24xf32>, vector<24x128xf32>, vector<8x128xf32> -> vector<8x128xf32>
    %c0_7 = arith.constant 0 : index
    %c0_8 = arith.constant 0 : index
    %13 = vector.load %arg4[%c0_7, %c0_8] : memref<8x1xf32, #tpu.memory_space<vmem>>, vector<8x1xf32>
    %14 = vector.broadcast %13 : vector<8x1xf32> to vector<8x128xf32>
    %15 = arith.addf %12, %14 : vector<8x128xf32>
    %c0_9 = arith.constant 0 : index
    %c0_10 = arith.constant 0 : index
    %c0_11 = arith.constant 0 : index
    %16 = vector.load %arg5[%c0_9, %c0_10, %c0_11] : memref<1x8x128xf32, #tpu.memory_space<vmem>>, vector<1x8x128xf32>
    %17 = vector.shape_cast %16 : vector<1x8x128xf32> to vector<8x128xf32>
    %18 = vector.shape_cast %15 : vector<8x128xf32> to vector<1x8x128xf32>
    tpu.vector_store %arg5[%c0_9, %c0_10, %c0_11], %18 {strides = array<i32>} : memref<1x8x128xf32, #tpu.memory_space<vmem>>, vector<1x8x128xf32>,
    return
  }
  func.func @transform_0(%arg0: i32, %arg1: i32) -> (i32, i32, i32, i32) {
    %c0_i32 = arith.constant 0 : i32
    %c0_i32_0 = arith.constant 0 : i32
    %c0_i32_1 = arith.constant 0 : i32
    return %arg0, %arg1, %c0_i32, %c0_i32_0 : i32, i32, i32, i32
  }
  func.func @transform_1(%arg0: i32, %arg1: i32) -> (i32, i32) {
    %c0_i32 = arith.constant 0 : i32
    %c0_i32_0 = arith.constant 0 : i32
    %c0_i32_1 = arith.constant 0 : i32
    return %c0_i32, %c0_i32_0 : i32, i32
  }
  func.func @transform_2(%arg0: i32, %arg1: i32) -> (i32, i32) {
    %c0_i32 = arith.constant 0 : i32
    %c0_i32_0 = arith.constant 0 : i32
    %c0_i32_1 = arith.constant 0 : i32
    return %c0_i32, %c0_i32_0 : i32, i32
  }
  func.func @transform_3(%arg0: i32, %arg1: i32) -> (i32, i32, i32) {
    %c0_i32 = arith.constant 0 : i32
    %c0_i32_0 = arith.constant 0 : i32
    return %arg0, %c0_i32, %arg1 : i32, i32, i32
  }
}

</mosaic_0001>

<llo_original>
// kernel: tpu_custom_call.1
$region0: #{tpu_custom_call.1}
  #allocation0 [shape = 'u32[]', space=smem, size = 0x4, offset = 0x4, fixed_abs, tag = 'smem constant byte address 0x4 - core index']
  #allocation1 [shape = 'u32[72,128]{1,0:T(1,128)}', space=vmem, size = 0x9000, scoped, tag = 'internal scratch']
  %s0 = inlined_call_operand.hbm [shape: f32[2,1,8,256], index: 0, kind: input, shape index: {}]
  %s1 = inlined_call_operand.vmem [shape: f32[8,24], index: 1, kind: input, shape index: {}]
  %s2 = inlined_call_operand.vmem [shape: f32[8,1], index: 2, kind: input, shape index: {}]
  %s3 = inlined_call_operand.hbm [shape: f32[2,8,128], index: 3, kind: output, shape index: {}]
  %s4 = sld [smem:[#allocation0]]
  $region49: #{tpu_custom_call.1} parent=0
    _
  %s6 = ssub.s32 1, %s4
  %s7 = scalar_select 0, %s6, %s4
  $region1: #{tpu_custom_call.1} parent=0
    #allocation2 [shape = 'u8[16384]{0}', space=vmem, size = 0x4000, scoped, tag = 'input window, operand 0']
    #allocation3 [shape = 's32[2]{0}', space=sflag, size = 0x8, scoped, tag = 'scoped memory for tpu_custom_call.1']
    #allocation4 [shape = 's32[2]{0}', space=sflag, size = 0x8, scoped, tag = 'scoped memory for tpu_custom_call.1']
    #allocation5 [shape = 'u8[8192]{0}', space=vmem, size = 0x2000, scoped, tag = 'output window, operand 0']
    %8 = vsyncpa [#allocation3], 0
    %s9 = scalar_lea.sflag [#allocation3], 1
    %10 = vsyncpa %s9, 0
    %11 = vsyncpa [#allocation4], 0
    %s12 = scalar_lea.sflag [#allocation4], 1
    %13 = vsyncpa %s12, 0
    loop: start=0, step=1, limit=4
    $region2: #{tpu_custom_call.1} parent=1 // loop_pre_header
      _
    $region3: #{tpu_custom_call.1} parent=1 // loop_header
      %s15 = sphi 0, %s19
      %p16 = scmp.ge.s32.totalorder %s15, 4
      %s22 = sphi 0, %s34
      %s23 = sphi 0, %s30
      %s24 = sphi 0, %s22
      %s25 = sphi 0, %s23
      %s26 = sphi 0, %s24
      %s27 = sphi 0, %s25
      %s39 = sphi 0, %s41
      %s42 = sphi 0, %s39
      %s43 = sphi 0, %s42
      %s59 = sphi 0, %s43
      %s63 = sphi 0, %s63
      %s65 = sphi 0, %s63
      %s66 = sphi 0, %s65
      %s80 = sphi 0, %s66
      %s84 = sphi 0, %s84
      %s86 = sphi 0, %s84
      %s87 = sphi 0, %s86
      %s101 = sphi 0, %s87
      %s109 = sphi 0, %s111
      %s112 = sphi 0, %s109
      %s113 = sphi 0, %s112
      %s129 = sphi 0, %s113
    $region4: #{tpu_custom_call.1} parent=1 // loop_header_branch
      %18 = sbr.rel (%p16) target = $region8
    $region5: #{tpu_custom_call.1} parent=1 // loop_body
      %s20 = ssub.s32 %s15, 1
      %s21 = ssub.s32 %s15, 2
      %s28 = sadd.s32 1, %s23
      %p29 = scmp.ge.s32.totalorder %s28, 1
      %s30 = scalar_select %p29, 0, %s28
      %s31 = sadd.s32 1, %s22
      %s32 = scalar_select %p29, %s31, %s22
      %p33 = scmp.ge.s32.totalorder %s32, 2
      %s34 = scalar_select %p33, 0, %s32
      %s35 = ssub.s32 %s22, %s34
      %s36 = ssub.s32 %s23, %s30
      %s37 = sor.u32 %s35, %s36
      %p38 = scmp.eq.s32.totalorder %s37, 0
      %s40 = sadd.s32 %s39, 1
      %s41 = scalar_select %p38, %s39, %s40
      %p44 = pneg %p38
      %p45 = scmp.eq.s32.totalorder %s15, 1
      %p46 = por %p44, %p45
      %p47 = scmp.ne.s32.totalorder %s39, %s42
      %p48 = scmp.eq.s32.totalorder %s15, 0
      %p49 = por %p47, %p48
      %p50 = scmp.ne.s32.totalorder %s39, %s42
      %p51 = scmp.eq.s32.totalorder %s20, 1
      %p52 = por %p50, %p51
      %p53 = scmp.ne.s32.totalorder %s42, %s43
      %p54 = scmp.eq.s32.totalorder %s20, 0
      %p55 = por %p53, %p54
      %p56 = scmp.ne.s32.totalorder %s42, %s43
      %p57 = scmp.eq.s32.totalorder %s21, 1
      %p58 = por %p56, %p57
      %p60 = scmp.ne.s32.totalorder %s43, %s59
      %p61 = scmp.eq.s32.totalorder %s21, 0
      %p62 = por %p60, %p61
      %s64 = sadd.s32 %s63, 1
      %p67 = scmp.eq.s32.totalorder %s15, 1
      %p68 = scmp.ne.s32.totalorder %s63, %s65
      %p69 = scmp.eq.s32.totalorder %s15, 0
      %p70 = por %p68, %p69
      %p71 = scmp.ne.s32.totalorder %s63, %s65
      %p72 = scmp.eq.s32.totalorder %s20, 1
      %p73 = por %p71, %p72
      %p74 = scmp.ne.s32.totalorder %s65, %s66
      %p75 = scmp.eq.s32.totalorder %s20, 0
      %p76 = por %p74, %p75
      %p77 = scmp.ne.s32.totalorder %s65, %s66
      %p78 = scmp.eq.s32.totalorder %s21, 1
      %p79 = por %p77, %p78
      %p81 = scmp.ne.s32.totalorder %s66, %s80
      %p82 = scmp.eq.s32.totalorder %s21, 0
      %p83 = por %p81, %p82
      %s85 = sadd.s32 %s84, 1
      %p88 = scmp.eq.s32.totalorder %s15, 1
      %p89 = scmp.ne.s32.totalorder %s84, %s86
      %p90 = scmp.eq.s32.totalorder %s15, 0
      %p91 = por %p89, %p90
      %p92 = scmp.ne.s32.totalorder %s84, %s86
      %p93 = scmp.eq.s32.totalorder %s20, 1
      %p94 = por %p92, %p93
      %p95 = scmp.ne.s32.totalorder %s86, %s87
      %p96 = scmp.eq.s32.totalorder %s20, 0
      %p97 = por %p95, %p96
      %p98 = scmp.ne.s32.totalorder %s86, %s87
      %p99 = scmp.eq.s32.totalorder %s21, 1
      %p100 = por %p98, %p99
      %p102 = scmp.ne.s32.totalorder %s87, %s101
      %p103 = scmp.eq.s32.totalorder %s21, 0
      %p104 = por %p102, %p103
      %s105 = ssub.s32 %s22, %s34
      %s106 = ssub.s32 %s23, %s30
      %s107 = sor.u32 %s105, %s106
      %p108 = scmp.eq.s32.totalorder %s107, 0
      %s110 = sadd.s32 %s109, 1
      %s111 = scalar_select %p108, %s109, %s110
      %p114 = pneg %p108
      %p115 = scmp.eq.s32.totalorder %s15, 1
      %p116 = por %p114, %p115
      %p117 = scmp.ne.s32.totalorder %s109, %s112
      %p118 = scmp.eq.s32.totalorder %s15, 0
      %p119 = por %p117, %p118
      %p120 = scmp.ne.s32.totalorder %s109, %s112
      %p121 = scmp.eq.s32.totalorder %s20, 1
      %p122 = por %p120, %p121
      %p123 = scmp.ne.s32.totalorder %s112, %s113
      %p124 = scmp.eq.s32.totalorder %s20, 0
      %p125 = por %p123, %p124
      %p126 = scmp.ne.s32.totalorder %s112, %s113
      %p127 = scmp.eq.s32.totalorder %s21, 1
      %p128 = por %p126, %p127
      %p130 = scmp.ne.s32.totalorder %s113, %s129
      %p131 = scmp.eq.s32.totalorder %s21, 0
      %p132 = por %p130, %p131
      %p133 = scmp.le.s32.totalorder 1, %s15
      %p134 = scmp.lt.s32.totalorder %s15, 3
      %p135 = pnand %p133, %p134
      %p136 = pneg %p135
      // Predicated region
      $region9: #{tpu_custom_call.1} parent=5 // pred_check
        _
      $region10: #{tpu_custom_call.1} parent=5 // pred_check_branch
        %138 = sbr.rel (%p135) target = $region12
      $region11: #{tpu_custom_call.1} parent=5 // pred_region
        %s139 = ssub.s32 %s15, 1
        // Predicated region
        $region13: #{tpu_custom_call.1} parent=11 // pred_check
          %p140 = pneg %p76
        $region14: #{tpu_custom_call.1} parent=11 // pred_check_branch
          %142 = sbr.rel (%p140) target = $region16
        $region15: #{tpu_custom_call.1} parent=11 // pred_region
          _
        $region16: #{tpu_custom_call.1} parent=11 // pred_fallthru
          _
        // Predicated region
        $region17: #{tpu_custom_call.1} parent=11 // pred_check
          %p143 = pneg %p97
        $region18: #{tpu_custom_call.1} parent=11 // pred_check_branch
          %145 = sbr.rel (%p143) target = $region20
        $region19: #{tpu_custom_call.1} parent=11 // pred_region
          _
        $region20: #{tpu_custom_call.1} parent=11 // pred_fallthru
          _
      $region12: #{tpu_custom_call.1} parent=5 // pred_fallthru
        _
      %p146 = scmp.lt.s32.totalorder %s15, 2
      // Predicated region
      $region21: #{tpu_custom_call.1} parent=5 // pred_check
        %p147 = pneg %p146
      $region22: #{tpu_custom_call.1} parent=5 // pred_check_branch
        %149 = sbr.rel (%p147) target = $region24
      $region23: #{tpu_custom_call.1} parent=5 // pred_region
        // Predicated region
        $region25: #{tpu_custom_call.1} parent=23 // pred_check
          %p150 = pneg %p49
        $region26: #{tpu_custom_call.1} parent=23 // pred_check_branch
          %152 = sbr.rel (%p150) target = $region28
        $region27: #{tpu_custom_call.1} parent=23 // pred_region
          %s153 = sand.u32 %s39, 1
          %s154 = scalar_lea.sflag [#allocation3], %s153
          %s155 = sand.u32 %s39, 1
          %s156 = smul.addr %s155, 16
          %s157 = scalar_lea.vmem [#allocation2], %s156
          %159 = vsyncadd %s154, 0
          %s160 = smul.addr %s23, 2
          %s161 = smul.addr %s22, 2
          %s162 = sadd.s32 %s160, %s161
          %s163 = smul.addr %s162, 8
          %s164 = scalar_lea.hbm %s0, %s163
          %s166 = sshll.u32 %s164, 4
          %s167 = int_to_ptr.hbm [resolvable:$true] %s166
          %s168 = sshll.u32 %s157, 4
          %s169 = int_to_ptr.vmem [resolvable:$true] %s168
          %171 = dma.hbm_to_vmem [thread:$0]  %s167, 256, %s169, %s154
        $region28: #{tpu_custom_call.1} parent=23 // pred_fallthru
          _
      $region24: #{tpu_custom_call.1} parent=5 // pred_fallthru
        _
      %p172 = scmp.le.s32.totalorder 1, %s15
      %p173 = scmp.lt.s32.totalorder %s15, 3
      %p174 = pnand %p172, %p173
      %p175 = pneg %p174
      // Predicated region
      $region29: #{tpu_custom_call.1} parent=5 // pred_check
        _
      $region30: #{tpu_custom_call.1} parent=5 // pred_check_branch
        %177 = sbr.rel (%p174) target = $region32
      $region31: #{tpu_custom_call.1} parent=5 // pred_region
        %s178 = ssub.s32 %s15, 1
        %s179 = sand.u32 %s42, 1
        %s180 = scalar_lea.sflag [#allocation3], %s179
        %s181 = sand.u32 %s42, 1
        %s182 = smul.addr %s181, 16
        %s183 = scalar_lea.vmem [#allocation2], %s182
        // Predicated region
        $region33: #{tpu_custom_call.1} parent=31 // pred_check
          %p184 = pneg %p55
        $region34: #{tpu_custom_call.1} parent=31 // pred_check_branch
          %186 = sbr.rel (%p184) target = $region36
        $region35: #{tpu_custom_call.1} parent=31 // pred_region
          %188 = dma.done %s180, 256
        $region36: #{tpu_custom_call.1} parent=31 // pred_fallthru
          _
        %s189 = sand.u32 %s42, 1
        %s190 = scalar_lea.sflag [#allocation3], %s189
        %s191 = sand.u32 %s42, 1
        %s192 = smul.addr %s191, 16
        %s193 = scalar_lea.vmem [#allocation2], %s192
        %p194 = pneg %p55
        %p195 = pneg %p52
        %p196 = pneg %p76
        %p197 = pneg %p73
        %p198 = pneg %p97
        %p199 = pneg %p94
        %p200 = pneg %p125
        %p201 = pneg %p122
        %s202 = sand.u32 %s112, 1
        %s203 = scalar_lea.sflag [#allocation4], %s202
        %s204 = sand.u32 %s112, 1
        %s205 = smul.addr %s204, 8
        %s206 = scalar_lea.vmem [#allocation5], %s205
        %v207 = vld [vmem:[%s183] sm:$0xff]
        %v208 = vld [vmem:[%s183 + $0x8] sm:$0xff]
        %vm209 = vcmp.gt.f32.partialorder %v207, 0.0
        %vm210 = vcmp.gt.f32.partialorder %v208, 0.0
        %v211 = vmul.f32 %v207, 0.01
        %v212 = vmul.f32 %v208, 0.01
        %v213 = vsel %vm209, %v207, %v211
        %v214 = vsel %vm210, %v208, %v212
        %v215 = vld [vmem:[%s1] sm:$0xff]
        %218 = vrot.lane.b32.xlu0 %v213, 126
        %v219 = vpop.permute.xlu0 %218
        %220 = vrot.lane.b32.xlu0 %v214, 126
        %v221 = vpop.permute.xlu0 %220
        %vm222 = vcmask 1031168
        %v223 = vsel %vm222, %v219, %v221
        %225 = vrot.lane.b32.xlu0 %v213, 124
        %v226 = vpop.permute.xlu0 %225
        %227 = vrot.lane.b32.xlu0 %v214, 124
        %v228 = vpop.permute.xlu0 %227
        %vm229 = vcmask 1014784
        %v230 = vsel %vm229, %v226, %v228
        %v232 = vld [vmem:[%s2] sm:$0xff]
        %234 = vset.pattern.permute.xlu0 0
        %235 = vperm.xlu0 %234, %v232
        %v236 = vpop.permute.xlu0 %235
        %vm238 = vcmask 195584
        %v240 = vsel %vm238, %v215, 0
        %242 = vmatpush.msra.mxu0 0.0
        %243 = vmatpush.msra.mxu0 0.0
        %244 = vmatpush.msra.mxu0 0.0
        %245 = vmatpush.msra.mxu0 0.0
        %246 = vmatpush.msra.mxu0 0.0
        %247 = vmatpush.msra.mxu0 0.0
        %248 = vmatpush.msra.mxu0 0.0
        %249 = vmatpush.msra.mxu0 0.0
        %250 = vmatpush.msra.mxu0 0.0
        %251 = vmatpush.msra.mxu0 0.0
        %252 = vmatpush.msra.mxu0 0.0
        %253 = vmatpush.msra.mxu0 0.0
        %254 = vmatpush.msra.mxu0 0.0
        %255 = vmatpush.msra.mxu0 %v230
        %256 = vmatpush.msra.mxu0 %v223
        %257 = vmatpush.msra.mxu0 %v213
        %258 = vmatmul.f32.gmra.mxu0 %v240
        %v259 = vpop.f32.mrf.mxu0
        %v260 = vadd.f32 %v236, %v259
        %261 = vdwg.mxu0
        %262 = vst [vmem:[%s206] sm:$0xff] %v260
        %s263 = sand.u32 %s112, 1
        %s264 = scalar_lea.sflag [#allocation4], %s263
        %s265 = sand.u32 %s112, 1
        %s266 = smul.addr %s265, 8
        %s267 = scalar_lea.vmem [#allocation5], %s266
        // Predicated region
        $region37: #{tpu_custom_call.1} parent=31 // pred_check
          %p268 = pneg %p122
        $region38: #{tpu_custom_call.1} parent=31 // pred_check_branch
          %270 = sbr.rel (%p268) target = $region40
        $region39: #{tpu_custom_call.1} parent=31 // pred_region
          %272 = vsyncadd %s264, 0
          %s273 = sadd.s32 %s25, %s24
          %s274 = smul.addr %s273, 8
          %s275 = scalar_lea.hbm %s3, %s274
          %s277 = sshll.u32 %s267, 4
          %s278 = int_to_ptr.vmem [resolvable:$true] %s277
          %s279 = sshll.u32 %s275, 4
          %s280 = int_to_ptr.hbm [resolvable:$true] %s279
          %282 = dma.vmem_to_hbm [thread:$0]  %s278, 128, %s280, %s264
        $region40: #{tpu_custom_call.1} parent=31 // pred_fallthru
          _
      $region32: #{tpu_custom_call.1} parent=5 // pred_fallthru
        _
      %p283 = scmp.le.s32.totalorder 2, %s15
      // Predicated region
      $region41: #{tpu_custom_call.1} parent=5 // pred_check
        %p284 = pneg %p283
      $region42: #{tpu_custom_call.1} parent=5 // pred_check_branch
        %286 = sbr.rel (%p284) target = $region44
      $region43: #{tpu_custom_call.1} parent=5 // pred_region
        %s287 = ssub.s32 %s15, 2
        // Predicated region
        $region45: #{tpu_custom_call.1} parent=43 // pred_check
          %p288 = pneg %p128
        $region46: #{tpu_custom_call.1} parent=43 // pred_check_branch
          %290 = sbr.rel (%p288) target = $region48
        $region47: #{tpu_custom_call.1} parent=43 // pred_region
          %s291 = sand.u32 %s113, 1
          %s292 = scalar_lea.sflag [#allocation4], %s291
          %s293 = sand.u32 %s113, 1
          %s294 = smul.addr %s293, 8
          %s295 = scalar_lea.vmem [#allocation5], %s294
          %297 = dma.done %s292, 128
        $region48: #{tpu_custom_call.1} parent=43 // pred_fallthru
          _
      $region44: #{tpu_custom_call.1} parent=5 // pred_fallthru
        _
    $region6: #{tpu_custom_call.1} parent=1 // loop_footer
      %s19 = sadd.s32 1, %s15
    $region7: #{tpu_custom_call.1} parent=1 // loop_footer_branch
      %14 = sbr.rel target = $region3
    $region8: #{tpu_custom_call.1} parent=1 // loop_exit
      _
    %298 = vsyncpa [#allocation3], 1
    %s299 = scalar_lea.sflag [#allocation3], 1
    %300 = vsyncpa %s299, 1
    %301 = vsyncpa [#allocation4], 1
    %s302 = scalar_lea.sflag [#allocation4], 1
    %303 = vsyncpa %s302, 1

</llo_original>
